<compile_context>
chip_gen: v6e
topology: v6e:2x2x1
jax: 0.10.0
libtpu: 0.0.40
codegen_flags: <defaults>
</compile_context>

<pallas_src>
import functools

import jax
import jax.numpy as jnp
from jax import lax
from jax.experimental import pallas as pl
from jax.experimental.pallas import tpu as pltpu

LANE = 128


def _chip_params():
    """Per-generation (bytes per pipeline buffer, vmem_limit_bytes)."""
    kind = ""
    try:
        kind = jax.devices()[0].device_kind.lower()
    except Exception:
        pass
    if "v7" in kind:
        # 64 MiB VMEM per TC: 6 MiB/buffer x 2 inputs x 2 buffers = 24 MiB
        # in flight -> comfortably under a 40 MiB scoped limit.
        return 6 << 20, 40 << 20
    if "v6" in kind:
        # 128 MiB physical VMEM: 8 MiB/buffer -> 32 MiB in flight.
        return 8 << 20, 64 << 20
    # v5e / unknown: stay inside the 16 MiB scoped-VMEM default.
    return 2 << 20, None


def _dice_kernel(total_rows, block_rows, blocks_per_core, need_mask,
                 p_ref, t_ref, out_ref, acc_pt_ref, acc_u_ref):
    c = pl.program_id(0)          # core / partial index ("parallel")
    i = pl.program_id(1)          # sequential reduction step ("arbitrary")

    @pl.when(i == 0)
    def _():
        acc_pt_ref[...] = jnp.zeros_like(acc_pt_ref)
        acc_u_ref[...] = jnp.zeros_like(acc_u_ref)

    start_row = (c * blocks_per_core + i) * block_rows

    def _accumulate(masked):
        # DMA moved the native dtype; upcast on the VPU (hidden under DMA).
        p = p_ref[...].astype(jnp.float32)
        t = t_ref[...].astype(jnp.float32)
        pt = p * t
        u = p + t                 # sum(p) + sum(t) == sum(p + t)
        if masked:
            # (block_rows, 1) iota; lanes handled by broadcasting.
            row = lax.broadcasted_iota(jnp.int32, (block_rows, 1), 0) + start_row
            valid = row < total_rows
            pt = jnp.where(valid, pt, 0.0)
            u = jnp.where(valid, u, 0.0)
        # Reduce the block to a single (1, W) row before accumulating so the
        # persistent accumulators stay tiny regardless of block size.
        acc_pt_ref[...] += jnp.sum(pt, axis=0, keepdims=True)
        acc_u_ref[...] += jnp.sum(u, axis=0, keepdims=True)

    if not need_mask:
        _accumulate(False)
    else:
        end_row = start_row + block_rows

        # Steady state: full blocks accumulate unmasked.
        @pl.when(end_row <= total_rows)
        def _():
            _accumulate(False)

        # Only the single ragged boundary block pays for the row mask.
        @pl.when(jnp.logical_and(start_row < total_rows, end_row > total_rows))
        def _():
            _accumulate(True)

        # Fully out-of-range (index-clamped padding) blocks contribute nothing.

    @pl.when(i == pl.num_programs(1) - 1)
    def _():
        out_ref[0, 0] = jnp.sum(acc_pt_ref[...])   # partial intersection
        out_ref[0, 1] = jnp.sum(acc_u_ref[...])    # partial union


def dice_loss(y_pred, y_true, smooth=1.0, *, block_bytes=None):
    """Matches DiceLoss.forward: scalar float32 result."""
    p = jnp.reshape(y_pred, (-1,))   # keep native dtype — no wrapper cast
    t = jnp.reshape(y_true, (-1,))
    n = p.shape[0]

    # Lane-unaligned tail (< 128 elems) is summed in plain JAX — avoids the
    # HBM-doubling jnp.pad copy this memory-bound kernel used to make.
    main = (n // LANE) * LANE
    if main == 0:
        pf = p.astype(jnp.float32)
        tf = t.astype(jnp.float32)
        inter = jnp.sum(pf * tf)
        union = jnp.sum(pf) + jnp.sum(tf)
        return (1.0 - (2.0 * inter + smooth) / (union + smooth)).astype(jnp.float32)

    if main != n:
        tp = p[main:].astype(jnp.float32)
        tt = t[main:].astype(jnp.float32)
        tail_inter = jnp.sum(tp * tt)
        tail_union = jnp.sum(tp + tt)
        p = p[:main]
        t = t[:main]
    else:
        tail_inter = jnp.float32(0.0)
        tail_union = jnp.float32(0.0)
    n = main

    # Widest lane-contiguous width that divides n exactly (free reshape).
    width = LANE
    for w in (1024, 512, 256, LANE):
        if n % w == 0:
            width = w
            break
    rows = n // width
    p2 = p.reshape(rows, width)
    t2 = t.reshape(rows, width)

    chip_block_bytes, vmem_limit = _chip_params()
    if block_bytes is None:
        block_bytes = chip_block_bytes

    itemsize = jnp.dtype(p2.dtype).itemsize
    # Native-dtype sublane tiles: (8,128) f32, (16,128) bf16, (32,128) int8/fp8.
    sublane = {4: 8, 2: 16, 1: 32}.get(itemsize, 8)
    target_elems = max(sublane * width, block_bytes // itemsize)
    max_block_rows = max(sublane, (target_elems // width) // sublane * sublane)
    block_rows = rows if rows <= max_block_rows else max_block_rows

    blocks_total = -(-rows // block_rows)
    # Leading "parallel" axis: 2 partials (both TCs on v7x; harmless — just a
    # sequential outer loop — on single-core v5e/v6e).
    num_cores = 2 if blocks_total >= 2 else 1
    blocks_per_core = -(-blocks_total // num_cores)

    need_mask = (rows % block_rows != 0) or (num_cores * blocks_per_core != blocks_total)

    if num_cores * blocks_per_core == blocks_total:
        def in_map(c, i):
            return (c * blocks_per_core + i, 0)
    else:
        last_block = blocks_total - 1

        def in_map(c, i):
            # Clamp padding steps onto the last real block; the kernel skips
            # their accumulation, so they cost only one wasted DMA.
            return (jnp.minimum(c * blocks_per_core + i, last_block), 0)

    kernel = functools.partial(
        _dice_kernel, rows, block_rows, blocks_per_core, need_mask)

    compiler_kwargs = dict(dimension_semantics=("parallel", "arbitrary"))
    if vmem_limit is not None:
        compiler_kwargs["vmem_limit_bytes"] = vmem_limit

    partials = pl.pallas_call(
        kernel,
        out_shape=jax.ShapeDtypeStruct((num_cores, 2), jnp.float32),
        grid_spec=pltpu.PrefetchScalarGridSpec(
            num_scalar_prefetch=0,
            grid=(num_cores, blocks_per_core),
            in_specs=[
                pl.BlockSpec((block_rows, width), in_map),
                pl.BlockSpec((block_rows, width), in_map),
            ],
            out_specs=pl.BlockSpec(
                (1, 2), lambda c, i: (c, 0), memory_space=pltpu.SMEM
            ),
            scratch_shapes=[
                pltpu.VMEM((1, width), jnp.float32),  # acc: sum(p*t)
                pltpu.VMEM((1, width), jnp.float32),  # acc: sum(p+t)
            ],
        ),
        compiler_params=pltpu.CompilerParams(**compiler_kwargs),
    )(p2, t2)

    intersection = jnp.sum(partials[:, 0]) + tail_inter
    union = jnp.sum(partials[:, 1]) + tail_union
    dice_coeff = (2.0 * intersection + smooth) / (union + smooth)
    return (1.0 - dice_coeff).astype(jnp.float32)


def dice_loss_ref(y_pred, y_true, smooth=1.0):
    p = jnp.reshape(y_pred, (-1,)).astype(jnp.float32)
    t = jnp.reshape(y_true, (-1,)).astype(jnp.float32)
    intersection = jnp.sum(p * t)
    union = jnp.sum(p) + jnp.sum(t)
    return 1.0 - (2.0 * intersection + smooth) / (union + smooth)


if __name__ == "__main__":
    key = jax.random.PRNGKey(0)
    k1, k2 = jax.random.split(key)

    # NCHW inputs: predicted probabilities and binary masks.
    y_pred = jax.nn.sigmoid(jax.random.normal(k1, (2, 4, 16, 16), jnp.float32))
    y_true = (jax.random.uniform(k2, (2, 4, 16, 16)) > 0.5).astype(jnp.float32)

    loss = jax.block_until_ready(dice_loss(y_pred, y_true, smooth=1.0))
    ref = jax.block_until_ready(dice_loss_ref(y_pred, y_true, smooth=1.0))
    assert jnp.allclose(loss, ref, rtol=1e-5, atol=1e-5), (loss, ref)

    # Native bf16 inputs (bf16 DMA; f32 accumulation in-kernel).
    yp_bf, yt_bf = y_pred.astype(jnp.bfloat16), y_true.astype(jnp.bfloat16)
    loss_bf = jax.block_until_ready(dice_loss(yp_bf, yt_bf, smooth=1.0))
    ref_bf = jax.block_until_ready(dice_loss_ref(yp_bf, yt_bf, smooth=1.0))
    assert jnp.allclose(loss_bf, ref_bf, rtol=1e-5, atol=1e-5), (loss_bf, ref_bf)

    # Odd-sized input: exercises the plain-JAX tail path (no jnp.pad copy).
    yp_odd = jax.nn.sigmoid(jax.random.normal(k1, (2, 3, 9, 11), jnp.float32))
    yt_odd = (jax.random.uniform(k2, (2, 3, 9, 11)) > 0.5).astype(jnp.float32)
    loss_odd = jax.block_until_ready(dice_loss(yp_odd, yt_odd, smooth=1.0))
    ref_odd = jax.block_until_ready(dice_loss_ref(yp_odd, yt_odd, smooth=1.0))
    assert jnp.allclose(loss_odd, ref_odd, rtol=1e-5, atol=1e-5), (loss_odd, ref_odd)

    # Small-shape stress of the multi-block / two-partial / ragged-boundary /
    # clamped-padding-block paths via a reduced block-size override.
    yp_r = jax.nn.sigmoid(jax.random.normal(k1, (37, 128), jnp.float32))
    yt_r = (jax.random.uniform(k2, (37, 128)) > 0.5).astype(jnp.float32)
    loss_r = jax.block_until_ready(
        dice_loss(yp_r, yt_r, smooth=1.0, block_bytes=8 * 128 * 4))
    ref_r = jax.block_until_ready(dice_loss_ref(yp_r, yt_r, smooth=1.0))
    assert jnp.allclose(loss_r, ref_r, rtol=1e-5, atol=1e-5), (loss_r, ref_r)

    loss_rb = jax.block_until_ready(
        dice_loss(yp_r.astype(jnp.bfloat16), yt_r.astype(jnp.bfloat16),
                  smooth=1.0, block_bytes=16 * 128 * 2))
    ref_rb = jax.block_until_ready(
        dice_loss_ref(yp_r.astype(jnp.bfloat16), yt_r.astype(jnp.bfloat16),
                      smooth=1.0))
    assert jnp.allclose(loss_rb, ref_rb, rtol=1e-5, atol=1e-5), (loss_rb, ref_rb)

    print("KERNEL_OK")
</pallas_src>

<mosaic_0001>
module attributes {stable_mosaic.version = 11 : i64} {
  func.func @_dice_kernel(%arg0: i32, %arg1: i32, %arg2: memref<2x1024xf32, #tpu.memory_space<vmem>>, %arg3: memref<2x1024xf32, #tpu.memory_space<vmem>>, %arg4: memref<1x2xf32, #tpu.memory_space<smem>>, %arg5: memref<1x1024xf32, #tpu.memory_space<vmem>>, %arg6: memref<1x1024xf32, #tpu.memory_space<vmem>>) attributes {dimension_semantics = [#tpu.dimension_semantics<parallel>, #tpu.dimension_semantics<arbitrary>], iteration_bounds = array<i64: 1, 1>, scalar_prefetch = 0 : i64, scratch_operands = 2 : i64, tpu.core_type = #tpu.core_type<tc>, window_params = [{transform_indices = @transform_0, window_bounds = array<i64: 2, 1024>}, {transform_indices = @transform_1, window_bounds = array<i64: 2, 1024>}, {transform_indices = @transform_2, window_bounds = array<i64: 1, 2>}]} {
    %c0_i32 = arith.constant 0 : i32
    %0 = arith.cmpi eq, %arg1, %c0_i32 : i32
    %1 = arith.extui %0 : i1 to i32
    %c0_i32_0 = arith.constant 0 : i32
    %2 = arith.cmpi ne, %1, %c0_i32_0 : i32
    scf.if %2 {
      %cst_15 = arith.constant 0.000000e+00 : f32
      %20 = vector.broadcast %cst_15 : f32 to vector<1x1024xf32>
      %c0_16 = arith.constant 0 : index
      %c0_17 = arith.constant 0 : index
      %21 = vector.load %arg5[%c0_16, %c0_17] : memref<1x1024xf32, #tpu.memory_space<vmem>>, vector<1x1024xf32>
      tpu.vector_store %arg5[%c0_16, %c0_17], %20 {strides = array<i32>} : memref<1x1024xf32, #tpu.memory_space<vmem>>, vector<1x1024xf32>,
      %cst_18 = arith.constant 0.000000e+00 : f32
      %22 = vector.broadcast %cst_18 : f32 to vector<1x1024xf32>
      %c0_19 = arith.constant 0 : index
      %c0_20 = arith.constant 0 : index
      %23 = vector.load %arg6[%c0_19, %c0_20] : memref<1x1024xf32, #tpu.memory_space<vmem>>, vector<1x1024xf32>
      tpu.vector_store %arg6[%c0_19, %c0_20], %22 {strides = array<i32>} : memref<1x1024xf32, #tpu.memory_space<vmem>>, vector<1x1024xf32>,
    } else {
    }
    %c0 = arith.constant 0 : index
    %c0_1 = arith.constant 0 : index
    %3 = vector.load %arg2[%c0, %c0_1] : memref<2x1024xf32, #tpu.memory_space<vmem>>, vector<2x1024xf32>
    %c0_2 = arith.constant 0 : index
    %c0_3 = arith.constant 0 : index
    %4 = vector.load %arg3[%c0_2, %c0_3] : memref<2x1024xf32, #tpu.memory_space<vmem>>, vector<2x1024xf32>
    %5 = arith.mulf %3, %4 : vector<2x1024xf32>
    %6 = arith.addf %3, %4 : vector<2x1024xf32>
    %c0_4 = arith.constant 0 : index
    %c0_5 = arith.constant 0 : index
    %7 = vector.load %arg5[%c0_4, %c0_5] : memref<1x1024xf32, #tpu.memory_space<vmem>>, vector<1x1024xf32>
    %cst = arith.constant dense<0.000000e+00> : vector<1024xf32>
    %8 = vector.multi_reduction <add>, %5, %cst [0] : vector<2x1024xf32> to vector<1024xf32>
    %9 = vector.shape_cast %8 : vector<1024xf32> to vector<1x1024xf32>
    %10 = arith.addf %7, %9 : vector<1x1024xf32>
    %c0_6 = arith.constant 0 : index
    %c0_7 = arith.constant 0 : index
    %11 = vector.load %arg5[%c0_6, %c0_7] : memref<1x1024xf32, #tpu.memory_space<vmem>>, vector<1x1024xf32>
    tpu.vector_store %arg5[%c0_6, %c0_7], %10 {strides = array<i32>} : memref<1x1024xf32, #tpu.memory_space<vmem>>, vector<1x1024xf32>,
    %c0_8 = arith.constant 0 : index
    %c0_9 = arith.constant 0 : index
    %12 = vector.load %arg6[%c0_8, %c0_9] : memref<1x1024xf32, #tpu.memory_space<vmem>>, vector<1x1024xf32>
    %cst_10 = arith.constant dense<0.000000e+00> : vector<1024xf32>
    %13 = vector.multi_reduction <add>, %6, %cst_10 [0] : vector<2x1024xf32> to vector<1024xf32>
    %14 = vector.shape_cast %13 : vector<1024xf32> to vector<1x1024xf32>
    %15 = arith.addf %12, %14 : vector<1x1024xf32>
    %c0_11 = arith.constant 0 : index
    %c0_12 = arith.constant 0 : index
    %16 = vector.load %arg6[%c0_11, %c0_12] : memref<1x1024xf32, #tpu.memory_space<vmem>>, vector<1x1024xf32>
    tpu.vector_store %arg6[%c0_11, %c0_12], %15 {strides = array<i32>} : memref<1x1024xf32, #tpu.memory_space<vmem>>, vector<1x1024xf32>,
    %c0_i32_13 = arith.constant 0 : i32
    %17 = arith.cmpi eq, %arg1, %c0_i32_13 : i32
    %18 = arith.extui %17 : i1 to i32
    %c0_i32_14 = arith.constant 0 : i32
    %19 = arith.cmpi ne, %18, %c0_i32_14 : i32
    scf.if %19 {
      %c0_15 = arith.constant 0 : index
      %c0_16 = arith.constant 0 : index
      %20 = vector.load %arg5[%c0_15, %c0_16] : memref<1x1024xf32, #tpu.memory_space<vmem>>, vector<1x1024xf32>
      %21 = vector.shape_cast %20 : vector<1x1024xf32> to vector<1x1x1024xf32>
      %cst_17 = arith.constant dense<0.000000e+00> : vector<1xf32>
      %22 = vector.multi_reduction <add>, %21, %cst_17 [1, 2] : vector<1x1x1024xf32> to vector<1xf32>
      %23 = vector.shape_cast %22 : vector<1xf32> to vector<1x1x1xf32>
      %24 = vector.extract %23[0, 0, 0] : f32 from vector<1x1x1xf32>
      %c0_18 = arith.constant 0 : index
      %c0_19 = arith.constant 0 : index
      %25 = memref.load %arg4[%c0_18, %c0_19] : memref<1x2xf32, #tpu.memory_space<smem>>
      memref.store %24, %arg4[%c0_18, %c0_19] : memref<1x2xf32, #tpu.memory_space<smem>>
      %c0_20 = arith.constant 0 : index
      %c0_21 = arith.constant 0 : index
      %26 = vector.load %arg6[%c0_20, %c0_21] : memref<1x1024xf32, #tpu.memory_space<vmem>>, vector<1x1024xf32>
      %27 = vector.shape_cast %26 : vector<1x1024xf32> to vector<1x1x1024xf32>
      %cst_22 = arith.constant dense<0.000000e+00> : vector<1xf32>
      %28 = vector.multi_reduction <add>, %27, %cst_22 [1, 2] : vector<1x1x1024xf32> to vector<1xf32>
      %29 = vector.shape_cast %28 : vector<1xf32> to vector<1x1x1xf32>
      %30 = vector.extract %29[0, 0, 0] : f32 from vector<1x1x1xf32>
      %c0_23 = arith.constant 0 : index
      %c1 = arith.constant 1 : index
      %31 = memref.load %arg4[%c0_23, %c1] : memref<1x2xf32, #tpu.memory_space<smem>>
      memref.store %30, %arg4[%c0_23, %c1] : memref<1x2xf32, #tpu.memory_space<smem>>
    } else {
    }
    return
  }
  func.func @transform_0(%arg0: i32, %arg1: i32) -> (i32, i32) {
    %c1_i32 = arith.constant 1 : i32
    %0 = arith.muli %arg0, %c1_i32 : i32
    %1 = arith.addi %0, %arg1 : i32
    %c0_i32 = arith.constant 0 : i32
    %c0_i32_0 = arith.constant 0 : i32
    return %1, %c0_i32 : i32, i32
  }
  func.func @transform_1(%arg0: i32, %arg1: i32) -> (i32, i32) {
    %c1_i32 = arith.constant 1 : i32
    %0 = arith.muli %arg0, %c1_i32 : i32
    %1 = arith.addi %0, %arg1 : i32
    %c0_i32 = arith.constant 0 : i32
    %c0_i32_0 = arith.constant 0 : i32
    return %1, %c0_i32 : i32, i32
  }
  func.func @transform_2(%arg0: i32, %arg1: i32) -> (i32, i32) {
    %c0_i32 = arith.constant 0 : i32
    %c0_i32_0 = arith.constant 0 : i32
    return %arg0, %c0_i32 : i32, i32
  }
}

</mosaic_0001>

<llo_original>
// kernel: tpu_custom_call.1
$region0: #{tpu_custom_call.1}
  #allocation0 [shape = 'u32[]', space=smem, size = 0x4, offset = 0x4, fixed_abs, tag = 'smem constant byte address 0x4 - core index']
  #allocation1 [shape = 'u32[144,128]{1,0:T(1,128)}', space=vmem, size = 0x12000, scoped, tag = 'internal scratch']
  #allocation2 [shape = 'f32[1,1024]{1,0:T(1,128)}', space=vmem, size = 0x1000, scoped, tag = 'scratch operand']
  #allocation3 [shape = 'f32[1,1024]{1,0:T(1,128)}', space=vmem, size = 0x1000, scoped, tag = 'scratch operand']
  %s0 = inlined_call_operand.hbm [shape: f32[2,1024], index: 0, kind: input, shape index: {}]
  %s1 = inlined_call_operand.hbm [shape: f32[2,1024], index: 1, kind: input, shape index: {}]
  %s2 = inlined_call_operand.hbm [shape: f32[1,2], index: 2, kind: output, shape index: {}]
  %s3 = sld [smem:[#allocation0]]
  $region34: #{tpu_custom_call.1} parent=0
    _
  %s5 = ssub.s32 1, %s3
  %s6 = scalar_select 0, %s5, %s3
  $region1: #{tpu_custom_call.1} parent=0
    #allocation4 [shape = 'u8[8192]{0}', space=vmem, size = 0x2000, scoped, tag = 'input window, operand 0, single buffered']
    #allocation5 [shape = 's32[1]{0}', space=sflag, size = 0x4, scoped, tag = 'scoped memory for tpu_custom_call.1']
    #allocation6 [shape = 's32[1]{0}', space=sflag, size = 0x4, scoped, tag = 'scoped memory for tpu_custom_call.1']
    #allocation7 [shape = 'u8[8192]{0}', space=vmem, size = 0x2000, scoped, tag = 'input window, operand 1, single buffered']
    #allocation8 [shape = 's32[1]{0}', space=sflag, size = 0x4, scoped, tag = 'scoped memory for tpu_custom_call.1']
    #allocation9 [shape = 'u8[512]{0}', space=smem, size = 0x200, scoped, tag = 'output window, operand 0, single buffered']
    %7 = vsyncpa [#allocation5], 0
    %8 = vsyncpa [#allocation8], 0
    %9 = vsyncpa [#allocation6], 0
    // Predicated region
    $region2: #{tpu_custom_call.1} parent=1 // pred_check
      _
    $region3: #{tpu_custom_call.1} parent=1 // pred_check_branch
      %11 = sbr.rel (0) target = $region5
    $region4: #{tpu_custom_call.1} parent=1 // pred_region
      %s12 = sadd.s32 0, 0
      %s14 = ssub.s32 256, 256
      %15 = vsyncadd [#allocation5], %s14
      %s16 = smul.addr %s12, 8
      %s17 = smul.addr %s16, 32
      %s18 = scalar_lea.hbm %s0, %s17
      %s20 = sshll.u32 [#allocation4], 4
      %s21 = int_to_ptr.vmem [resolvable:$true] %s20
      %23 = dma.hbm_to_vmem [thread:$0]  %s18, 256, %s21, [#allocation5]
    $region5: #{tpu_custom_call.1} parent=1 // pred_fallthru
      _
    // Predicated region
    $region6: #{tpu_custom_call.1} parent=1 // pred_check
      _
    $region7: #{tpu_custom_call.1} parent=1 // pred_check_branch
      %25 = sbr.rel (0) target = $region9
    $region8: #{tpu_custom_call.1} parent=1 // pred_region
      %s26 = sadd.s32 0, 0
      %s28 = ssub.s32 256, 256
      %29 = vsyncadd [#allocation8], %s28
      %s30 = smul.addr %s26, 8
      %s31 = smul.addr %s30, 32
      %s32 = scalar_lea.hbm %s1, %s31
      %s34 = sshll.u32 [#allocation7], 4
      %s35 = int_to_ptr.vmem [resolvable:$true] %s34
      %37 = dma.hbm_to_vmem [thread:$0]  %s32, 256, %s35, [#allocation8]
    $region9: #{tpu_custom_call.1} parent=1 // pred_fallthru
      _
    // Predicated region
    $region10: #{tpu_custom_call.1} parent=1 // pred_check
      _
    $region11: #{tpu_custom_call.1} parent=1 // pred_check_branch
      %39 = sbr.rel (0) target = $region13
    $region12: #{tpu_custom_call.1} parent=1 // pred_region
      %40 = dma.done [#allocation5], 256
    $region13: #{tpu_custom_call.1} parent=1 // pred_fallthru
      _
    // Predicated region
    $region14: #{tpu_custom_call.1} parent=1 // pred_check
      _
    $region15: #{tpu_custom_call.1} parent=1 // pred_check_branch
      %42 = sbr.rel (0) target = $region17
    $region16: #{tpu_custom_call.1} parent=1 // pred_region
      %43 = dma.done [#allocation8], 256
    $region17: #{tpu_custom_call.1} parent=1 // pred_fallthru
      _
    %s44 = sadd.s32 0, 0
    %s45 = sadd.s32 0, 0
    %p46 = scmp.eq.s32.totalorder 0, 0
    // Predicated region
    $region18: #{tpu_custom_call.1} parent=1 // pred_check
      %p47 = pneg %p46
    $region19: #{tpu_custom_call.1} parent=1 // pred_check_branch
      %49 = sbr.rel (%p47) target = $region21
    $region20: #{tpu_custom_call.1} parent=1 // pred_region
      %50 = vst [vmem:[#allocation2] sm:$0xff] 0.0
      %51 = vst [vmem:[#allocation3] sm:$0xff] 0.0
    $region21: #{tpu_custom_call.1} parent=1 // pred_fallthru
      _
    %v52 = vld [vmem:[#allocation4] sm:$0xff]
    %v53 = vld [vmem:[#allocation4 + $0x8] sm:$0xff]
    %v54 = vld [vmem:[#allocation7] sm:$0xff]
    %v55 = vld [vmem:[#allocation7 + $0x8] sm:$0xff]
    %v56 = vmul.f32 %v52, %v54
    %v57 = vmul.f32 %v53, %v55
    %v58 = vadd.f32 %v52, %v54
    %v59 = vadd.f32 %v53, %v55
    %v60 = vld [vmem:[#allocation2] sm:$0xff]
    %v63 = vcombine.high %v56, %v56
    %v65 = vunpack.c.l.s4 1983009808
    %v66 = vunpack.c.0.s8 %v65
    %v67 = vlaneseq
    %v68 = vshrl.u32 %v67, 7
    %v69 = vsub.s32 %v66, %v68
    %v70 = vrot.slane %v56, %v69
    %v72 = vunpack.c.l.s4 1983009808
    %v73 = vunpack.c.0.s8 %v72
    %v74 = vlaneseq
    %v75 = vshrl.u32 %v74, 7
    %v76 = vsub.s32 %v73, %v75
    %v77 = vrot.slane %v63, %v76
    %v78 = vcombine.high %v70, %v70
    %v79 = vcombine.high %v77, %v77
    %v80 = vcombine.high %v57, %v57
    %v82 = vunpack.c.l.s4 1983009808
    %v83 = vunpack.c.0.s8 %v82
    %v84 = vlaneseq
    %v85 = vshrl.u32 %v84, 7
    %v86 = vsub.s32 %v83, %v85
    %v87 = vrot.slane %v57, %v86
    %v89 = vunpack.c.l.s4 1983009808
    %v90 = vunpack.c.0.s8 %v89
    %v91 = vlaneseq
    %v92 = vshrl.u32 %v91, 7
    %v93 = vsub.s32 %v90, %v92
    %v94 = vrot.slane %v80, %v93
    %v95 = vcombine.high %v87, %v87
    %v96 = vcombine.high %v94, %v94
    %vm105 = vcmask 1041408
    %v106 = vsel %vm105, %v70, 0.0
    %v107 = vrot.slane %v106, 4
    %v108 = vadd.f32 %v106, %v107
    %v109 = vrot.slane %v108, 2
    %v110 = vadd.f32 %v108, %v109
    %v111 = vrot.slane %v110, 1
    %v112 = vadd.f32 %v110, %v111
    %v113 = vsel %vm105, %v78, 0.0
    %v114 = vrot.slane %v113, 4
    %v115 = vadd.f32 %v113, %v114
    %v116 = vrot.slane %v115, 2
    %v117 = vadd.f32 %v115, %v116
    %v118 = vrot.slane %v117, 1
    %v119 = vadd.f32 %v117, %v118
    %v120 = vsel %vm105, %v77, 0.0
    %v121 = vrot.slane %v120, 4
    %v122 = vadd.f32 %v120, %v121
    %v123 = vrot.slane %v122, 2
    %v124 = vadd.f32 %v122, %v123
    %v125 = vrot.slane %v124, 1
    %v126 = vadd.f32 %v124, %v125
    %v127 = vsel %vm105, %v79, 0.0
    %v128 = vrot.slane %v127, 4
    %v129 = vadd.f32 %v127, %v128
    %v130 = vrot.slane %v129, 2
    %v131 = vadd.f32 %v129, %v130
    %v132 = vrot.slane %v131, 1
    %v133 = vadd.f32 %v131, %v132
    %v134 = vsel %vm105, %v87, 0.0
    %v135 = vrot.slane %v134, 4
    %v136 = vadd.f32 %v134, %v135
    %v137 = vrot.slane %v136, 2
    %v138 = vadd.f32 %v136, %v137
    %v139 = vrot.slane %v138, 1
    %v140 = vadd.f32 %v138, %v139
    %v141 = vsel %vm105, %v95, 0.0
    %v142 = vrot.slane %v141, 4
    %v143 = vadd.f32 %v141, %v142
    %v144 = vrot.slane %v143, 2
    %v145 = vadd.f32 %v143, %v144
    %v146 = vrot.slane %v145, 1
    %v147 = vadd.f32 %v145, %v146
    %v148 = vsel %vm105, %v94, 0.0
    %v149 = vrot.slane %v148, 4
    %v150 = vadd.f32 %v148, %v149
    %v151 = vrot.slane %v150, 2
    %v152 = vadd.f32 %v150, %v151
    %v153 = vrot.slane %v152, 1
    %v154 = vadd.f32 %v152, %v153
    %v155 = vsel %vm105, %v96, 0.0
    %v156 = vrot.slane %v155, 4
    %v157 = vadd.f32 %v155, %v156
    %v158 = vrot.slane %v157, 2
    %v159 = vadd.f32 %v157, %v158
    %v160 = vrot.slane %v159, 1
    %v161 = vadd.f32 %v159, %v160
    %v170 = vcombine.low %v112, %v119
    %v171 = vcombine.low %v126, %v133
    %v172 = vcombine.low %v140, %v147
    %v173 = vcombine.low %v154, %v161
    %v175 = vunpack.c.l.s4 1966171168
    %v176 = vunpack.c.0.s8 %v175
    %v177 = vlaneseq
    %v178 = vshrl.u32 %v177, 7
    %v179 = vsub.s32 %v176, %v178
    %v180 = vrot.slane %v170, %v179
    %v182 = vunpack.c.l.s4 1966171168
    %v183 = vunpack.c.0.s8 %v182
    %v184 = vlaneseq
    %v185 = vshrl.u32 %v184, 7
    %v186 = vsub.s32 %v183, %v185
    %v187 = vrot.slane %v171, %v186
    %v189 = vunpack.c.l.s4 1966171168
    %v190 = vunpack.c.0.s8 %v189
    %v191 = vlaneseq
    %v192 = vshrl.u32 %v191, 7
    %v193 = vsub.s32 %v190, %v192
    %v194 = vrot.slane %v172, %v193
    %v196 = vunpack.c.l.s4 1966171168
    %v197 = vunpack.c.0.s8 %v196
    %v198 = vlaneseq
    %v199 = vshrl.u32 %v198, 7
    %v200 = vsub.s32 %v197, %v199
    %v201 = vrot.slane %v173, %v200
    %v202 = vcombine.low %v180, %v187
    %v203 = vcombine.low %v194, %v201
    %v205 = vunpack.c.l.s4 1966171168
    %v206 = vunpack.c.0.s8 %v205
    %v207 = vlaneseq
    %v208 = vshrl.u32 %v207, 7
    %v209 = vsub.s32 %v206, %v208
    %v210 = vrot.slane %v202, %v209
    %v212 = vunpack.c.l.s4 1966171168
    %v213 = vunpack.c.0.s8 %v212
    %v214 = vlaneseq
    %v215 = vshrl.u32 %v214, 7
    %v216 = vsub.s32 %v213, %v215
    %v217 = vrot.slane %v203, %v216
    %v218 = vcombine.low %v210, %v217
    %v220 = vadd.f32 %v60, %v218
    %221 = vst [vmem:[#allocation2] sm:$0xff] %v220
    %v222 = vld [vmem:[#allocation3] sm:$0xff]
    %v225 = vcombine.high %v58, %v58
    %v227 = vunpack.c.l.s4 1983009808
    %v228 = vunpack.c.0.s8 %v227
    %v229 = vlaneseq
    %v230 = vshrl.u32 %v229, 7
    %v231 = vsub.s32 %v228, %v230
    %v232 = vrot.slane %v58, %v231
    %v234 = vunpack.c.l.s4 1983009808
    %v235 = vunpack.c.0.s8 %v234
    %v236 = vlaneseq
    %v237 = vshrl.u32 %v236, 7
    %v238 = vsub.s32 %v235, %v237
    %v239 = vrot.slane %v225, %v238
    %v240 = vcombine.high %v232, %v232
    %v241 = vcombine.high %v239, %v239
    %v242 = vcombine.high %v59, %v59
    %v244 = vunpack.c.l.s4 1983009808
    %v245 = vunpack.c.0.s8 %v244
    %v246 = vlaneseq
    %v247 = vshrl.u32 %v246, 7
    %v248 = vsub.s32 %v245, %v247
    %v249 = vrot.slane %v59, %v248
    %v251 = vunpack.c.l.s4 1983009808
    %v252 = vunpack.c.0.s8 %v251
    %v253 = vlaneseq
    %v254 = vshrl.u32 %v253, 7
    %v255 = vsub.s32 %v252, %v254
    %v256 = vrot.slane %v242, %v255
    %v257 = vcombine.high %v249, %v249
    %v258 = vcombine.high %v256, %v256
    %v267 = vsel %vm105, %v232, 0.0
    %v268 = vrot.slane %v267, 4
    %v269 = vadd.f32 %v267, %v268
    %v270 = vrot.slane %v269, 2
    %v271 = vadd.f32 %v269, %v270
    %v272 = vrot.slane %v271, 1
    %v273 = vadd.f32 %v271, %v272
    %v274 = vsel %vm105, %v240, 0.0
    %v275 = vrot.slane %v274, 4
    %v276 = vadd.f32 %v274, %v275
    %v277 = vrot.slane %v276, 2
    %v278 = vadd.f32 %v276, %v277
    %v279 = vrot.slane %v278, 1
    %v280 = vadd.f32 %v278, %v279
    %v281 = vsel %vm105, %v239, 0.0
    %v282 = vrot.slane %v281, 4
    %v283 = vadd.f32 %v281, %v282
    %v284 = vrot.slane %v283, 2
    %v285 = vadd.f32 %v283, %v284
    %v286 = vrot.slane %v285, 1
    %v287 = vadd.f32 %v285, %v286
    %v288 = vsel %vm105, %v241, 0.0
    %v289 = vrot.slane %v288, 4
    %v290 = vadd.f32 %v288, %v289
    %v291 = vrot.slane %v290, 2
    %v292 = vadd.f32 %v290, %v291
    %v293 = vrot.slane %v292, 1
    %v294 = vadd.f32 %v292, %v293
    %v295 = vsel %vm105, %v249, 0.0
    %v296 = vrot.slane %v295, 4
    %v297 = vadd.f32 %v295, %v296
    %v298 = vrot.slane %v297, 2
    %v299 = vadd.f32 %v297, %v298
    %v300 = vrot.slane %v299, 1
    %v301 = vadd.f32 %v299, %v300
    %v302 = vsel %vm105, %v257, 0.0
    %v303 = vrot.slane %v302, 4
    %v304 = vadd.f32 %v302, %v303
    %v305 = vrot.slane %v304, 2
    %v306 = vadd.f32 %v304, %v305
    %v307 = vrot.slane %v306, 1
    %v308 = vadd.f32 %v306, %v307
    %v309 = vsel %vm105, %v256, 0.0
    %v310 = vrot.slane %v309, 4
    %v311 = vadd.f32 %v309, %v310
    %v312 = vrot.slane %v311, 2
    %v313 = vadd.f32 %v311, %v312
    %v314 = vrot.slane %v313, 1
    %v315 = vadd.f32 %v313, %v314
    %v316 = vsel %vm105, %v258, 0.0
    %v317 = vrot.slane %v316, 4
    %v318 = vadd.f32 %v316, %v317
    %v319 = vrot.slane %v318, 2
    %v320 = vadd.f32 %v318, %v319
    %v321 = vrot.slane %v320, 1
    %v322 = vadd.f32 %v320, %v321
    %v331 = vcombine.low %v273, %v280
    %v332 = vcombine.low %v287, %v294
    %v333 = vcombine.low %v301, %v308
    %v334 = vcombine.low %v315, %v322
    %v336 = vunpack.c.l.s4 1966171168
    %v337 = vunpack.c.0.s8 %v336
    %v338 = vlaneseq
    %v339 = vshrl.u32 %v338, 7
    %v340 = vsub.s32 %v337, %v339
    %v341 = vrot.slane %v331, %v340
    %v343 = vunpack.c.l.s4 1966171168
    %v344 = vunpack.c.0.s8 %v343
    %v345 = vlaneseq
    %v346 = vshrl.u32 %v345, 7
    %v347 = vsub.s32 %v344, %v346
    %v348 = vrot.slane %v332, %v347
    %v350 = vunpack.c.l.s4 1966171168
    %v351 = vunpack.c.0.s8 %v350
    %v352 = vlaneseq
    %v353 = vshrl.u32 %v352, 7
    %v354 = vsub.s32 %v351, %v353
    %v355 = vrot.slane %v333, %v354
    %v357 = vunpack.c.l.s4 1966171168
    %v358 = vunpack.c.0.s8 %v357
    %v359 = vlaneseq
    %v360 = vshrl.u32 %v359, 7
    %v361 = vsub.s32 %v358, %v360
    %v362 = vrot.slane %v334, %v361
    %v363 = vcombine.low %v341, %v348
    %v364 = vcombine.low %v355, %v362
    %v366 = vunpack.c.l.s4 1966171168
    %v367 = vunpack.c.0.s8 %v366
    %v368 = vlaneseq
    %v369 = vshrl.u32 %v368, 7
    %v370 = vsub.s32 %v367, %v369
    %v371 = vrot.slane %v363, %v370
    %v373 = vunpack.c.l.s4 1966171168
    %v374 = vunpack.c.0.s8 %v373
    %v375 = vlaneseq
    %v376 = vshrl.u32 %v375, 7
    %v377 = vsub.s32 %v374, %v376
    %v378 = vrot.slane %v364, %v377
    %v379 = vcombine.low %v371, %v378
    %v381 = vadd.f32 %v222, %v379
    %382 = vst [vmem:[#allocation3] sm:$0xff] %v381
    // Predicated region
    $region22: #{tpu_custom_call.1} parent=1 // pred_check
      %p383 = pneg %p46
    $region23: #{tpu_custom_call.1} parent=1 // pred_check_branch
      %385 = sbr.rel (%p383) target = $region25
    $region24: #{tpu_custom_call.1} parent=1 // pred_region
      %v386 = vld [vmem:[#allocation2] sm:$0xff]
      %v388 = vlaneseq
      %v389 = vshrl.u32 %v388, 7
      %v390 = vsub.s32 0, %v389
      %v391 = vrot.slane %v386, %v390
      %v392 = vlaneseq
      %v393 = vshrl.u32 %v392, 7
      %v394 = vsub.s32 1, %v393
      %v395 = vrot.slane %v386, %v394
      %v396 = vlaneseq
      %v397 = vshrl.u32 %v396, 7
      %v398 = vsub.s32 2, %v397
      %v399 = vrot.slane %v386, %v398
      %v400 = vlaneseq
      %v401 = vshrl.u32 %v400, 7
      %v402 = vsub.s32 3, %v401
      %v403 = vrot.slane %v386, %v402
      %v404 = vlaneseq
      %v405 = vshrl.u32 %v404, 7
      %v406 = vsub.s32 4, %v405
      %v407 = vrot.slane %v386, %v406
      %v408 = vlaneseq
      %v409 = vshrl.u32 %v408, 7
      %v410 = vsub.s32 5, %v409
      %v411 = vrot.slane %v386, %v410
      %v412 = vlaneseq
      %v413 = vshrl.u32 %v412, 7
      %v414 = vsub.s32 6, %v413
      %v415 = vrot.slane %v386, %v414
      %v416 = vlaneseq
      %v417 = vshrl.u32 %v416, 7
      %v418 = vsub.s32 7, %v417
      %v419 = vrot.slane %v386, %v418
      %vm428 = vcmask 1040384
      %v429 = vsel %vm428, %v391, 0.0
      %v430 = vsel %vm428, %v395, 0.0
      %v431 = vadd.f32 %v429, %v430
      %v432 = vsel %vm428, %v399, 0.0
      %v433 = vadd.f32 %v431, %v432
      %v434 = vsel %vm428, %v403, 0.0
      %v435 = vadd.f32 %v433, %v434
      %v436 = vsel %vm428, %v407, 0.0
      %v437 = vadd.f32 %v435, %v436
      %v438 = vsel %vm428, %v411, 0.0
      %v439 = vadd.f32 %v437, %v438
      %v440 = vsel %vm428, %v415, 0.0
      %v441 = vadd.f32 %v439, %v440
      %v442 = vsel %vm428, %v419, 0.0
      %v443 = vadd.f32 %v441, %v442
      %444 = vadd.xlane.f32.xlu0 %v443
      %v445 = vpop.xlane.xlu0 %444
      %v446 = vrot.slane %v445, 4
      %v447 = vadd.f32 %v445, %v446
      %v448 = vrot.slane %v447, 2
      %v449 = vadd.f32 %v447, %v448
      %v450 = vrot.slane %v449, 1
      %v451 = vadd.f32 %v449, %v450
      %s452 = vtos %v451
      %s453 = scalar_lea.smem [#allocation9], 0
      %454 = sst [smem:[%s453]] %s452
      %v455 = vld [vmem:[#allocation3] sm:$0xff]
      %v457 = vlaneseq
      %v458 = vshrl.u32 %v457, 7
      %v459 = vsub.s32 0, %v458
      %v460 = vrot.slane %v455, %v459
      %v461 = vlaneseq
      %v462 = vshrl.u32 %v461, 7
      %v463 = vsub.s32 1, %v462
      %v464 = vrot.slane %v455, %v463
      %v465 = vlaneseq
      %v466 = vshrl.u32 %v465, 7
      %v467 = vsub.s32 2, %v466
      %v468 = vrot.slane %v455, %v467
      %v469 = vlaneseq
      %v470 = vshrl.u32 %v469, 7
      %v471 = vsub.s32 3, %v470
      %v472 = vrot.slane %v455, %v471
      %v473 = vlaneseq
      %v474 = vshrl.u32 %v473, 7
      %v475 = vsub.s32 4, %v474
      %v476 = vrot.slane %v455, %v475
      %v477 = vlaneseq
      %v478 = vshrl.u32 %v477, 7
      %v479 = vsub.s32 5, %v478
      %v480 = vrot.slane %v455, %v479
      %v481 = vlaneseq
      %v482 = vshrl.u32 %v481, 7
      %v483 = vsub.s32 6, %v482
      %v484 = vrot.slane %v455, %v483
      %v485 = vlaneseq
      %v486 = vshrl.u32 %v485, 7
      %v487 = vsub.s32 7, %v486
      %v488 = vrot.slane %v455, %v487
      %v497 = vsel %vm428, %v460, 0.0
      %v498 = vsel %vm428, %v464, 0.0
      %v499 = vadd.f32 %v497, %v498
      %v500 = vsel %vm428, %v468, 0.0
      %v501 = vadd.f32 %v499, %v500
      %v502 = vsel %vm428, %v472, 0.0
      %v503 = vadd.f32 %v501, %v502
      %v504 = vsel %vm428, %v476, 0.0
      %v505 = vadd.f32 %v503, %v504
      %v506 = vsel %vm428, %v480, 0.0
      %v507 = vadd.f32 %v505, %v506
      %v508 = vsel %vm428, %v484, 0.0
      %v509 = vadd.f32 %v507, %v508
      %v510 = vsel %vm428, %v488, 0.0
      %v511 = vadd.f32 %v509, %v510
      %512 = vadd.xlane.f32.xlu0 %v511
      %v513 = vpop.xlane.xlu0 %512
      %v514 = vrot.slane %v513, 4
      %v515 = vadd.f32 %v513, %v514
      %v516 = vrot.slane %v515, 2
      %v517 = vadd.f32 %v515, %v516
      %v518 = vrot.slane %v517, 1
      %v519 = vadd.f32 %v517, %v518
      %s520 = vtos %v519
      %s521 = scalar_lea.smem [#allocation9], 1
      %522 = sst [smem:[%s521]] %s520
    $region25: #{tpu_custom_call.1} parent=1 // pred_fallthru
      _
    // Predicated region
    $region26: #{tpu_custom_call.1} parent=1 // pred_check
      _
    $region27: #{tpu_custom_call.1} parent=1 // pred_check_branch
      %524 = sbr.rel (0) target = $region29
    $region28: #{tpu_custom_call.1} parent=1 // pred_region
      %s526 = ssub.s32 16, 16
      %527 = vsyncadd [#allocation6], %s526
      %530 = dma.smem_to_hbm [#allocation9], 16, %s2, [#allocation6]
    $region29: #{tpu_custom_call.1} parent=1 // pred_fallthru
      _
    // Predicated region
    $region30: #{tpu_custom_call.1} parent=1 // pred_check
      _
    $region31: #{tpu_custom_call.1} parent=1 // pred_check_branch
      %532 = sbr.rel (0) target = $region33
    $region32: #{tpu_custom_call.1} parent=1 // pred_region
      %533 = dma.done [#allocation6], 16
    $region33: #{tpu_custom_call.1} parent=1 // pred_fallthru
      _
    %534 = sfence
    %535 = vsyncpa [#allocation5], 1
    %536 = vsyncpa [#allocation8], 1
    %537 = vsyncpa [#allocation6], 1

</llo_original>
